<compile_context>
chip_gen: v6e
topology: v6e:2x2x1
jax: 0.10.0
libtpu: 0.0.40
codegen_flags: <defaults>
</compile_context>

<pallas_src>
import jax
import jax.numpy as jnp
from jax.experimental import pallas as pl
from jax.experimental.pallas import tpu as pltpu

_MAX_BLOCK_BYTES = 2 * 1024 * 1024  # per-block budget; 4 live buffers -> ~8 MiB VMEM


def _swish_kernel(x_ref, o_ref):
    xf = x_ref[...].astype(jnp.float32)
    sig = 1.0 / (1.0 + jnp.exp(-xf))           # exp -> EUP; mem-bound so free
    o_ref[...] = (xf * sig).astype(o_ref.dtype)


@jax.jit
def swish(x):
    """Elementwise swish. Accepts any shape (e.g. NCHW), returns same shape/dtype."""
    orig_shape = x.shape
    orig_dtype = x.dtype
    n = x.size
    itemsize = jnp.dtype(orig_dtype).itemsize

    x_flat = jnp.ravel(x)  # contiguous -> metadata-only under jit

    # Widest lane-dense last dim that divides n exactly (no padding needed).
    lane = None
    for cand in (4096, 2048, 1024, 512, 256, 128):
        if n >= cand and n % cand == 0:
            lane = cand
            break

    padded = lane is None
    if padded:
        # Fallback: zero-pad to a 128-multiple lane width (swish(0)=0, so the
        # pad region is harmless).  Pad/slice fuse under jit.
        lane = max(128, min(1024, pl.next_power_of_2(n)))
        n_pad = pl.cdiv(n, lane) * lane
        x_flat = jnp.pad(x_flat, (0, n_pad - n))
    else:
        n_pad = n

    rows = n_pad // lane
    x2d = x_flat.reshape(rows, lane)

    # Block rows: as many as fit the byte budget, multiple of 8, or the full
    # row extent for small arrays (full-extent block dims are always legal).
    rows_cap = max(8, _MAX_BLOCK_BYTES // (lane * itemsize))
    if rows <= rows_cap:
        block_rows = rows
    else:
        block_rows = (rows_cap // 8) * 8

    grid = (pl.cdiv(rows, block_rows),)

    out2d = pl.pallas_call(
        _swish_kernel,
        out_shape=jax.ShapeDtypeStruct((rows, lane), orig_dtype),
        grid_spec=pltpu.PrefetchScalarGridSpec(
            num_scalar_prefetch=0,
            grid=grid,
            in_specs=[pl.BlockSpec((block_rows, lane), lambda i: (i, 0))],
            out_specs=pl.BlockSpec((block_rows, lane), lambda i: (i, 0)),
        ),
        compiler_params=pltpu.CompilerParams(
            dimension_semantics=("parallel",)
        ),
    )(x2d)

    if padded:
        return out2d.reshape(-1)[:n].reshape(orig_shape)
    return out2d.reshape(orig_shape)  # metadata-only


if __name__ == "__main__":
    key = jax.random.PRNGKey(0)
    # NCHW input, same convention as PyTorch (Swish has no parameters).
    x = jax.random.normal(key, (2, 4, 16, 16), dtype=jnp.float32)

    y = jax.block_until_ready(swish(x))

    # Sanity check against plain JAX reference.
    y_ref = x * jax.nn.sigmoid(x)
    assert y.shape == x.shape and y.dtype == x.dtype
    assert jnp.allclose(y, y_ref, atol=1e-6, rtol=1e-6)

    # Also exercise an awkwardly-sized input (hits the padded fallback path).
    x2 = jax.random.normal(jax.random.PRNGKey(1), (3, 5, 33, 47), dtype=jnp.float32)
    y2 = jax.block_until_ready(swish(x2))
    assert jnp.allclose(y2, x2 * jax.nn.sigmoid(x2), atol=1e-6, rtol=1e-6)

    # And a large input that exercises the multi-block pipelined path.
    x3 = jax.random.normal(jax.random.PRNGKey(2), (8, 64, 64, 64), dtype=jnp.float32)
    y3 = jax.block_until_ready(swish(x3))
    assert jnp.allclose(y3, x3 * jax.nn.sigmoid(x3), atol=1e-6, rtol=1e-6)

    print("KERNEL_OK")
</pallas_src>

<mosaic_0001>
module attributes {stable_mosaic.version = 11 : i64} {
  func.func @_swish_kernel(%arg0: i32, %arg1: memref<1x2048xf32, #tpu.memory_space<vmem>>, %arg2: memref<1x2048xf32, #tpu.memory_space<vmem>>) attributes {dimension_semantics = [#tpu.dimension_semantics<parallel>], iteration_bounds = array<i64: 1>, scalar_prefetch = 0 : i64, scratch_operands = 0 : i64, tpu.core_type = #tpu.core_type<tc>, window_params = [{transform_indices = @transform_0, window_bounds = array<i64: 1, 2048>}, {transform_indices = @transform_1, window_bounds = array<i64: 1, 2048>}]} {
    %c0 = arith.constant 0 : index
    %c0_0 = arith.constant 0 : index
    %0 = vector.load %arg1[%c0, %c0_0] : memref<1x2048xf32, #tpu.memory_space<vmem>>, vector<1x2048xf32>
    %cst = arith.constant 0.000000e+00 : f32
    %1 = vector.broadcast %cst : f32 to vector<1x2048xf32>
    %2 = arith.subf %1, %0 : vector<1x2048xf32>
    %3 = math.exp %2 : vector<1x2048xf32>
    %cst_1 = arith.constant 1.000000e+00 : f32
    %4 = vector.broadcast %cst_1 : f32 to vector<1x2048xf32>
    %5 = arith.addf %4, %3 : vector<1x2048xf32>
    %cst_2 = arith.constant 1.000000e+00 : f32
    %6 = vector.broadcast %cst_2 : f32 to vector<1x2048xf32>
    %7 = arith.divf %6, %5 : vector<1x2048xf32>
    %8 = arith.mulf %0, %7 : vector<1x2048xf32>
    %c0_3 = arith.constant 0 : index
    %c0_4 = arith.constant 0 : index
    %9 = vector.load %arg2[%c0_3, %c0_4] : memref<1x2048xf32, #tpu.memory_space<vmem>>, vector<1x2048xf32>
    tpu.vector_store %arg2[%c0_3, %c0_4], %8 {strides = array<i32>} : memref<1x2048xf32, #tpu.memory_space<vmem>>, vector<1x2048xf32>,
    return
  }
  func.func @transform_0(%arg0: i32) -> (i32, i32) {
    %c0_i32 = arith.constant 0 : i32
    %c0_i32_0 = arith.constant 0 : i32
    return %arg0, %c0_i32 : i32, i32
  }
  func.func @transform_1(%arg0: i32) -> (i32, i32) {
    %c0_i32 = arith.constant 0 : i32
    %c0_i32_0 = arith.constant 0 : i32
    return %arg0, %c0_i32 : i32, i32
  }
}

</mosaic_0001>

<llo_original>
// kernel: swish.1
$region0: #{swish.1}
  #allocation0 [shape = 'u32[]', space=smem, size = 0x4, offset = 0x4, fixed_abs, tag = 'smem constant byte address 0x4 - core index']
  #allocation1 [shape = 'u32[144,128]{1,0:T(1,128)}', space=vmem, size = 0x12000, scoped, tag = 'internal scratch']
  %s0 = inlined_call_operand.vmem [shape: f32[1,2048], index: 0, kind: input, shape index: {}]
  %s1 = inlined_call_operand.vmem [shape: f32[1,2048], index: 1, kind: output, shape index: {}]
  %s2 = sld [smem:[#allocation0]]
  $region14: #{swish.1} parent=0
    _
  %s4 = ssub.s32 1, %s2
  %s5 = scalar_select 0, %s4, %s2
  // Predicated region
  $region2: #{swish.1} parent=0 // pred_check
    _
  $region3: #{swish.1} parent=0 // pred_check_branch
    %7 = sbr.rel (0) target = $region5
  $region4: #{swish.1} parent=0 // pred_region
    _
  $region5: #{swish.1} parent=0 // pred_fallthru
    _
  %v8 = vld [vmem:[%s0] sm:$0xff]
  %v9 = vld [vmem:[%s0 + $0x8] sm:$0xff]
  %v10 = vsub.f32 0.0, %v8
  %v11 = vsub.f32 0.0, %v9
  %v12 = vmul.f32 %v10, 1.442695
  %v13 = vpow.pop %v12
  %v14 = vmul.f32 %v11, 1.442695
  %v15 = vpow.pop %v14
  %v16 = vadd.f32 %v13, 1.0
  %v17 = vadd.f32 %v15, 1.0
  %v18 = vrcp.pop %v16
  %v19 = vmul.f32 1.0, %v18
  %v20 = vrcp.pop %v17
  %v21 = vmul.f32 1.0, %v20
  %v22 = vmul.f32 %v8, %v19
  %v23 = vmul.f32 %v9, %v21
  %24 = vst [vmem:[%s1] sm:$0xff] %v22
  %25 = vst [vmem:[%s1 + $0x8] sm:$0xff] %v23
  // Predicated region
  $region6: #{swish.1} parent=0 // pred_check
    _
  $region7: #{swish.1} parent=0 // pred_check_branch
    %27 = sbr.rel (0) target = $region9
  $region8: #{swish.1} parent=0 // pred_region
    _
  $region9: #{swish.1} parent=0 // pred_fallthru
    _
  // Predicated region
  $region10: #{swish.1} parent=0 // pred_check
    _
  $region11: #{swish.1} parent=0 // pred_check_branch
    %29 = sbr.rel (0) target = $region13
  $region12: #{swish.1} parent=0 // pred_region
    _
  $region13: #{swish.1} parent=0 // pred_fallthru
    _

</llo_original>
